<compile_context>
chip_gen: v6e
topology: v6e:2x2x1
jax: 0.10.0
libtpu: 0.0.40
codegen_flags: <defaults>
</compile_context>

<pallas_src>
import functools

import jax
import jax.numpy as jnp
from jax.experimental import pallas as pl
from jax.experimental.pallas import tpu as pltpu


# --------------------------------------------------------------------------- #
# Kernel
# --------------------------------------------------------------------------- #
def _argmin_simplex_kernel(obj_ref, out_ref, *, upcast_to_f32):
    """Per-block linear-program-over-simplex solve: one-hot at the row argmin."""
    obj = obj_ref[...]                                    # (TB, N) native dtype
    if upcast_to_f32 and obj.dtype != jnp.float32:
        # v5e-and-older only: no bf16 VALU/EUP, keep the reduction on the f32
        # datapath.  On v6e/v7x we stay in bf16 (min returns an element of the
        # row, so the eq-based lowest-index tie-break is exact) to halve the
        # live intermediate bytes per tile.
        obj = obj.astype(jnp.float32)
    row_min = jnp.min(obj, axis=-1, keepdims=True)        # (TB, 1)   XLU
    col = jax.lax.broadcasted_iota(jnp.int32, obj.shape, 1)
    big = jnp.iinfo(jnp.int32).max
    # lowest column index attaining the minimum (torch.argmin tie-breaking)
    masked_idx = jnp.where(obj == row_min, col, big)      # (TB, N) int32
    min_idx = jnp.min(masked_idx, axis=-1, keepdims=True)
    out_ref[...] = (col == min_idx).astype(out_ref.dtype)
    # TODO(synk): optional bf16 micro-opt — pack sign-fixed value into the high
    # 16 bits and the column index into the low 16 bits of one sortable int32
    # key and reduce once; removes one XLU pass + the int32 masked_idx
    # intermediate.  Not needed at the current (small) tile sizes.


# --------------------------------------------------------------------------- #
# Chip / tiling heuristics
# --------------------------------------------------------------------------- #
def _device_kind():
    try:
        return jax.devices()[0].device_kind.lower()
    except Exception:  # pragma: no cover
        return ""


def _needs_f32_upcast(kind):
    """bf16 VALU exists on v6e / v7x; everything older (or unknown) upcasts."""
    return not any(tag in kind for tag in ("v6", "v7", "7x"))


def _step_io_target(kind):
    """Per-grid-step in+out HBM bytes.  v7x's faster HBM makes per-step
    overhead relatively larger, so use bigger steps there."""
    return (4 << 20) if any(tag in kind for tag in ("v7", "7x")) else (2 << 20)


def _choose_block_b(B, N, in_itemsize, out_itemsize, compute_in_f32,
                    *, step_io_target, vmem_live_budget=12 << 20, min_steps=8):
    """Batch tile: big enough to hide the ~0.35 us/step overhead, small enough
    that double-buffered in/out blocks PLUS in-kernel intermediates fit the
    VMEM budget, and leaving >= min_steps grid steps (when B allows) so the
    BlockSpec pipeline (and v7x's two TensorCores) stays busy."""
    # sublane tiling: f32 -> 8 rows, bf16 -> 16, int8/fp8 -> 32
    row_mult = max(8, 32 // in_itemsize)
    io_row = N * (in_itemsize + out_itemsize)             # HBM bytes per row
    # intermediates: (f32 obj copy) + int32 iota + int32 masked_idx (+ slack)
    interm_row = N * (12 if compute_in_f32 else 10)
    live_row = 2 * io_row + interm_row                    # 2x = double buffer
    rows_hbm = max(1, step_io_target // io_row)
    rows_vmem = max(1, vmem_live_budget // live_row)
    max_rows = max(row_mult, (min(rows_hbm, rows_vmem) // row_mult) * row_mult)
    # rows per step if the batch is split into >= min_steps roughly equal tiles
    rows_for_steps = pl.cdiv(pl.cdiv(B, min_steps), row_mult) * row_mult
    return max(row_mult, min(max_rows, rows_for_steps))


# --------------------------------------------------------------------------- #
# Wrapper (the module's forward)
# --------------------------------------------------------------------------- #
def abstract_estimator_forward(obj, *, block_b=None, out_dtype=jnp.bfloat16):
    """Solve argmin_{x in simplex} <obj[b], x> for every row b.

    Returns a one-hot (B, N) array in `out_dtype` (default bfloat16: 0/1 are
    exact and writeback traffic is halved vs f32 on this HBM-bound kernel).
    """
    B, N = obj.shape
    in_dtype = jnp.dtype(obj.dtype)
    out_dtype = jnp.dtype(out_dtype)

    kind = _device_kind()
    upcast_to_f32 = _needs_f32_upcast(kind)
    compute_in_f32 = upcast_to_f32 or in_dtype == jnp.dtype(jnp.float32)

    if block_b is None:
        block_b = _choose_block_b(
            B, N, in_dtype.itemsize, out_dtype.itemsize, compute_in_f32,
            step_io_target=_step_io_target(kind))

    # Non-divisible grid: no wrapper-side jnp.pad round trip.  Rows are
    # independent, so garbage in the tail of the last input block is harmless
    # and out-of-bounds output rows are masked on writeback.
    grid = (pl.cdiv(B, block_b),)

    # VMEM limit derived from the actual tile (double-buffered in/out blocks
    # plus in-kernel intermediates) with a small margin — no blanket 32 MiB.
    interm_per_elem = 12 if compute_in_f32 else 10
    live_bytes = block_b * N * (2 * (in_dtype.itemsize + out_dtype.itemsize)
                                + interm_per_elem)
    vmem_limit = int(min(32 << 20, max(8 << 20, live_bytes + (4 << 20))))

    kernel = functools.partial(_argmin_simplex_kernel,
                               upcast_to_f32=upcast_to_f32)

    return pl.pallas_call(
        kernel,
        out_shape=jax.ShapeDtypeStruct((B, N), out_dtype),
        grid_spec=pltpu.PrefetchScalarGridSpec(
            num_scalar_prefetch=0,
            grid=grid,
            in_specs=[pl.BlockSpec((block_b, N), lambda i: (i, 0))],
            out_specs=pl.BlockSpec((block_b, N), lambda i: (i, 0)),
        ),
        compiler_params=pltpu.CompilerParams(
            dimension_semantics=("parallel",),
            vmem_limit_bytes=vmem_limit,
        ),
    )(obj)


def _reference_forward(obj, out_dtype):
    """Pure-JAX reference: one-hot at per-row argmin."""
    idx = jnp.argmin(obj, axis=-1)
    return jax.nn.one_hot(idx, obj.shape[-1], dtype=out_dtype)


# --------------------------------------------------------------------------- #
# Self-test
# --------------------------------------------------------------------------- #
if __name__ == "__main__":
    key = jax.random.PRNGKey(0)
    k1, k2, k3 = jax.random.split(key, 3)

    # --- test 1: small f32 batch (single grid step, bf16 one-hot output) ---
    B1, N1 = 8, 128
    obj1 = jax.random.normal(k1, (B1, N1), dtype=jnp.float32)
    out1 = jax.block_until_ready(abstract_estimator_forward(obj1))
    ref1 = _reference_forward(obj1, out1.dtype)
    assert out1.shape == (B1, N1) and out1.dtype == jnp.bfloat16
    assert jnp.array_equal(out1, ref1), "f32 Pallas output mismatch vs reference"
    assert jnp.allclose(out1.astype(jnp.float32).sum(-1), 1.0)

    # --- test 2: bf16 input, multi-step grid, bf16 datapath on v6e/v7x ---
    B2, N2 = 48, 256
    obj2 = jax.random.normal(k2, (B2, N2), dtype=jnp.float32).astype(jnp.bfloat16)
    out2 = jax.block_until_ready(abstract_estimator_forward(obj2))
    ref2 = _reference_forward(obj2, out2.dtype)
    assert out2.shape == (B2, N2) and out2.dtype == jnp.bfloat16
    assert jnp.array_equal(out2, ref2), "bf16 Pallas output mismatch vs reference"
    assert jnp.allclose(out2.astype(jnp.float32).sum(-1), 1.0)

    # --- test 3: ragged batch — non-divisible grid, no wrapper pad copy ---
    B3, N3 = 20, 128
    obj3 = jax.random.normal(k3, (B3, N3), dtype=jnp.float32)
    out3 = jax.block_until_ready(
        abstract_estimator_forward(obj3, block_b=8, out_dtype=jnp.float32))
    ref3 = _reference_forward(obj3, out3.dtype)
    assert out3.shape == (B3, N3) and out3.dtype == jnp.float32
    assert jnp.array_equal(out3, ref3), "ragged Pallas output mismatch vs reference"
    assert jnp.allclose(out3.sum(-1), 1.0)

    print("KERNEL_OK")
</pallas_src>

<mosaic_0001>
module attributes {stable_mosaic.version = 11 : i64} {
  func.func @_argmin_simplex_kernel(%arg0: i32, %arg1: memref<8x128xf32, #tpu.memory_space<vmem>>, %arg2: memref<8x128xbf16, #tpu.memory_space<vmem>>) attributes {dimension_semantics = [#tpu.dimension_semantics<parallel>], iteration_bounds = array<i64: 1>, scalar_prefetch = 0 : i64, scratch_operands = 0 : i64, tpu.core_type = #tpu.core_type<tc>, window_params = [{transform_indices = @transform_0, window_bounds = array<i64: 8, 128>}, {transform_indices = @transform_1, window_bounds = array<i64: 8, 128>}]} {
    %c0 = arith.constant 0 : index
    %c0_0 = arith.constant 0 : index
    %0 = vector.load %arg1[%c0, %c0_0] : memref<8x128xf32, #tpu.memory_space<vmem>>, vector<8x128xf32>
    %cst = arith.constant dense<0x7F800000> : vector<8xf32>
    %1 = vector.multi_reduction <minimumf>, %0, %cst [1] : vector<8x128xf32> to vector<8xf32>
    %2 = vector.shape_cast %1 : vector<8xf32> to vector<8x1xf32>
    %3 = tpu.iota {dimensions = array<i32: 1>} : vector<8x128xi32>
    %4 = vector.broadcast %2 : vector<8x1xf32> to vector<8x128xf32>
    %5 = arith.cmpf oeq, %0, %4 : vector<8x128xf32>
    %c2147483647_i32 = arith.constant 2147483647 : i32
    %6 = vector.broadcast %c2147483647_i32 : i32 to vector<8x128xi32>
    %7 = arith.select %5, %3, %6 : vector<8x128xi1>, vector<8x128xi32>
    %cst_1 = arith.constant dense<2147483647> : vector<8xi32>
    %8 = vector.multi_reduction <minsi>, %7, %cst_1 [1] : vector<8x128xi32> to vector<8xi32>
    %9 = vector.shape_cast %8 : vector<8xi32> to vector<8x1xi32>
    %10 = vector.broadcast %9 : vector<8x1xi32> to vector<8x128xi32>
    %11 = arith.cmpi eq, %3, %10 : vector<8x128xi32>
    %12 = arith.extui %11 : vector<8x128xi1> to vector<8x128xi32>
    %13 = arith.sitofp %12 : vector<8x128xi32> to vector<8x128xf32>
    %14 = arith.truncf %13 : vector<8x128xf32> to vector<8x128xbf16>
    %c0_2 = arith.constant 0 : index
    %c0_3 = arith.constant 0 : index
    %15 = vector.load %arg2[%c0_2, %c0_3] : memref<8x128xbf16, #tpu.memory_space<vmem>>, vector<8x128xbf16>
    tpu.vector_store %arg2[%c0_2, %c0_3], %14 {strides = array<i32>} : memref<8x128xbf16, #tpu.memory_space<vmem>>, vector<8x128xbf16>,
    return
  }
  func.func @transform_0(%arg0: i32) -> (i32, i32) {
    %c0_i32 = arith.constant 0 : i32
    %c0_i32_0 = arith.constant 0 : i32
    return %arg0, %c0_i32 : i32, i32
  }
  func.func @transform_1(%arg0: i32) -> (i32, i32) {
    %c0_i32 = arith.constant 0 : i32
    %c0_i32_0 = arith.constant 0 : i32
    return %arg0, %c0_i32 : i32, i32
  }
}

</mosaic_0001>

<llo_original>
// kernel: tpu_custom_call.1
$region0: #{tpu_custom_call.1}
  #allocation0 [shape = 'u32[]', space=smem, size = 0x4, offset = 0x4, fixed_abs, tag = 'smem constant byte address 0x4 - core index']
  #allocation1 [shape = 'u32[144,128]{1,0:T(1,128)}', space=vmem, size = 0x12000, scoped, tag = 'internal scratch']
  %s0 = inlined_call_operand.hbm [shape: f32[8,128], index: 0, kind: input, shape index: {}]
  %s1 = inlined_call_operand.hbm [shape: bf16[8,128], index: 1, kind: output, shape index: {}]
  %s2 = sld [smem:[#allocation0]]
  $region18: #{tpu_custom_call.1} parent=0
    _
  %s4 = ssub.s32 1, %s2
  %s5 = scalar_select 0, %s4, %s2
  $region1: #{tpu_custom_call.1} parent=0
    #allocation2 [shape = 'u8[4096]{0}', space=vmem, size = 0x1000, scoped, tag = 'input window, operand 0, single buffered']
    #allocation3 [shape = 's32[1]{0}', space=sflag, size = 0x4, scoped, tag = 'scoped memory for tpu_custom_call.1']
    #allocation4 [shape = 's32[1]{0}', space=sflag, size = 0x4, scoped, tag = 'scoped memory for tpu_custom_call.1']
    #allocation5 [shape = 'u8[2048]{0}', space=vmem, size = 0x800, scoped, tag = 'output window, operand 0, single buffered']
    %6 = vsyncpa [#allocation3], 0
    %7 = vsyncpa [#allocation4], 0
    // Predicated region
    $region2: #{tpu_custom_call.1} parent=1 // pred_check
      _
    $region3: #{tpu_custom_call.1} parent=1 // pred_check_branch
      %9 = sbr.rel (0) target = $region5
    $region4: #{tpu_custom_call.1} parent=1 // pred_region
      %s11 = ssub.s32 128, 128
      %12 = vsyncadd [#allocation3], %s11
      %s14 = sshll.u32 [#allocation2], 4
      %s15 = int_to_ptr.vmem [resolvable:$true] %s14
      %17 = dma.hbm_to_vmem [thread:$0]  %s0, 128, %s15, [#allocation3]
    $region5: #{tpu_custom_call.1} parent=1 // pred_fallthru
      _
    // Predicated region
    $region6: #{tpu_custom_call.1} parent=1 // pred_check
      _
    $region7: #{tpu_custom_call.1} parent=1 // pred_check_branch
      %19 = sbr.rel (0) target = $region9
    $region8: #{tpu_custom_call.1} parent=1 // pred_region
      %20 = dma.done [#allocation3], 128
    $region9: #{tpu_custom_call.1} parent=1 // pred_fallthru
      _
    %v21 = vld [vmem:[#allocation2] sm:$0xff]
    %22 = vmin.xlane.f32.xlu0 %v21
    %v23 = vpop.xlane.xlu0 %22
    %v24 = vlaneseq
    %v25 = vand.u32 %v24, 127
    %vm26 = vcmp.eq.f32.partialorder %v21, %v23
    %v27 = vsel %vm26, %v25, 2147483647
    %v28 = vand.u32 %v27, 65535
    %v29 = vshra.s32 %v27, 16
    %v30 = vcvt.s32.f32 %v28
    %v31 = vcvt.s32.f32 %v29
    %32 = vmin.xlane.f32.xlu0 %v31
    %v33 = vpop.xlane.xlu0 %32
    %vm34 = vcmp.eq.f32.partialorder %v31, %v33
    %v35 = vsel %vm34, %v30, inf
    %36 = vmin.xlane.f32.xlu0 %v35
    %v37 = vpop.xlane.xlu0 %36
    %v38 = vcvt.f32.s32 %v37
    %v39 = vcvt.f32.s32 %v33
    %v40 = vshll.u32 %v39, 16
    %v41 = vadd.s32 %v40, %v38
    %vm42 = vcmp.eq.s32.totalorder %v25, %v41
    %v43 = vsel %vm42, 1, 0
    %v44 = vcvt.s32.f32 %v43
    %v45 = vpack.c.bf16 %v44, %v44
    %46 = vst [vmem:[#allocation5] sm:$0xf] %v45
    // Predicated region
    $region10: #{tpu_custom_call.1} parent=1 // pred_check
      _
    $region11: #{tpu_custom_call.1} parent=1 // pred_check_branch
      %48 = sbr.rel (0) target = $region13
    $region12: #{tpu_custom_call.1} parent=1 // pred_region
      %s50 = ssub.s32 64, 64
      %51 = vsyncadd [#allocation4], %s50
      %s53 = sshll.u32 [#allocation5], 4
      %s54 = int_to_ptr.vmem [resolvable:$true] %s53
      %56 = dma.vmem_to_hbm [thread:$0]  %s54, 64, %s1, [#allocation4]
    $region13: #{tpu_custom_call.1} parent=1 // pred_fallthru
      _
    // Predicated region
    $region14: #{tpu_custom_call.1} parent=1 // pred_check
      _
    $region15: #{tpu_custom_call.1} parent=1 // pred_check_branch
      %58 = sbr.rel (0) target = $region17
    $region16: #{tpu_custom_call.1} parent=1 // pred_region
      %59 = dma.done [#allocation4], 64
    $region17: #{tpu_custom_call.1} parent=1 // pred_fallthru
      _
    %60 = vsyncpa [#allocation3], 1
    %61 = vsyncpa [#allocation4], 1

</llo_original>
